<compile_context>
chip_gen: v5e
topology: v5e:2x2
jax: 0.10.0
libtpu: 0.0.40
codegen_flags: <defaults>
</compile_context>

<pallas_src>
import functools

import jax
import jax.numpy as jnp
from jax.experimental import pallas as pl
from jax.experimental.pallas import tpu as pltpu


def _round_up(x, m):
    return ((x + m - 1) // m) * m


def _patch_matmul_kernel(x_ref, w_ref, b_ref, o_ref):
    # x_ref: (tm, Kp) patch tile, w_ref: (Kp, tn) weight tile, b_ref: (1, tn).
    acc = jnp.dot(x_ref[...], w_ref[...], preferred_element_type=jnp.float32)
    o_ref[...] = (acc + b_ref[...]).astype(o_ref.dtype)


def _vmem_bytes(tm, tn, kp):
    # Each pallas-managed buffer is double-buffered (x4 bytes, f32).
    return 2 * 4 * (tm * kp + kp * tn + tn + tm * tn)


@functools.partial(jax.jit, static_argnames=("patch_size",))
def patches_forward(x, weight, bias, patch_size):
    """Forward pass equivalent to Patches.forward (Conv2d stride=kernel=P).

    Args:
      x:      (B, C, H, W) float32, NCHW like PyTorch.
      weight: (hidden_dim, C, P, P) float32 (PyTorch conv weight layout).
      bias:   (hidden_dim,) float32.
    Returns:
      (B, hidden_dim, H//P, W//P) float32.
    """
    B, C, H, W = x.shape
    P = patch_size
    O = weight.shape[0]
    Hp, Wp = H // P, W // P
    num_patches = Hp * Wp

    # --- glue: extract non-overlapping patches, flatten as (c, kh, kw) ---
    xp = x.reshape(B, C, Hp, P, Wp, P)
    xp = xp.transpose(0, 2, 4, 1, 3, 5)               # (B, Hp, Wp, C, P, P)
    xp = xp.reshape(B * num_patches, C * P * P)       # (M, K)

    w_mat = weight.reshape(O, C * P * P).T            # (K, N)
    b_mat = bias.reshape(1, O)                        # (1, N)

    M, K = xp.shape
    N = O

    # --- tile sizing (lane-dense, VMEM-safe even on v7x) ---
    Kp = _round_up(K, 128)                            # keep K as a single block
    tm = min(512, _round_up(M, 8))                    # M tile: multiple of 8
    tn = min(512, _round_up(N, 128))                  # N tile: multiple of 128

    # Shrink tiles if the double-buffered working set is too large.
    budget = 24 * 1024 * 1024
    while _vmem_bytes(tm, tn, Kp) > budget and tm > 8:
        tm = max(8, _round_up(tm // 2, 8))
    while _vmem_bytes(tm, tn, Kp) > budget and tn > 128:
        tn = max(128, _round_up(tn // 2, 128))

    Mp = _round_up(M, tm)
    Np = _round_up(N, tn)

    # Zero-pad: K-padding contributes 0 to the dot; M/N padding sliced off below.
    xp = jnp.pad(xp, ((0, Mp - M), (0, Kp - K)))
    w_mat = jnp.pad(w_mat, ((0, Kp - K), (0, Np - N)))
    b_mat = jnp.pad(b_mat, ((0, 0), (0, Np - N)))

    # Grid: N outer, M inner -> weight/bias blocks are invariant across the
    # inner M loop (DMA'd once per outer step); only patch tiles stream.
    grid = (Np // tn, Mp // tm)

    cost = pl.CostEstimate(
        flops=2 * Mp * Kp * Np,
        transcendentals=0,
        bytes_accessed=(Mp * Kp + Kp * Np + Mp * Np + Np) * 4,
    )

    out = pl.pallas_call(
        _patch_matmul_kernel,
        out_shape=jax.ShapeDtypeStruct((Mp, Np), x.dtype),
        grid=grid,
        in_specs=[
            pl.BlockSpec((tm, Kp), lambda j, i: (i, 0)),   # patch tiles (stream)
            pl.BlockSpec((Kp, tn), lambda j, i: (0, j)),   # weights (resident)
            pl.BlockSpec((1, tn), lambda j, i: (0, j)),    # bias (resident)
        ],
        out_specs=pl.BlockSpec((tm, tn), lambda j, i: (i, j)),
        compiler_params=pltpu.CompilerParams(
            dimension_semantics=("parallel", "parallel")),
        cost_estimate=cost,
    )(xp, w_mat, b_mat)

    # --- slice off padding, back to NCHW-style conv output ---
    out = out[:M, :N]
    out = out.reshape(B, Hp, Wp, O).transpose(0, 3, 1, 2)
    return out


if __name__ == "__main__":
    # Small shapes consistent with the module:
    # batch=2, in_channels=4, img_size=16, patch_size=4, hidden_dim=32
    B, C, IMG, P, HID = 2, 4, 16, 4, 32

    key = jax.random.PRNGKey(0)
    kx, kw, kb = jax.random.split(key, 3)
    x = jax.random.normal(kx, (B, C, IMG, IMG), dtype=jnp.float32)
    weight = jax.random.normal(kw, (HID, C, P, P), dtype=jnp.float32) * 0.05
    bias = jax.random.normal(kb, (HID,), dtype=jnp.float32) * 0.05

    out = patches_forward(x, weight, bias, P)
    out = jax.block_until_ready(out)

    # Reference check against XLA conv (same semantics as nn.Conv2d stride=P).
    ref = jax.lax.conv_general_dilated(
        x, weight, window_strides=(P, P), padding="VALID",
        dimension_numbers=("NCHW", "OIHW", "NCHW"),
    ) + bias.reshape(1, HID, 1, 1)

    assert out.shape == (B, HID, IMG // P, IMG // P), out.shape
    assert jnp.allclose(out, ref, atol=1e-4, rtol=1e-4), "mismatch vs conv ref"

    print("KERNEL_OK")
</pallas_src>

<mosaic_0001>
module attributes {stable_mosaic.version = 11 : i64} {
  func.func @_patch_matmul_kernel(%arg0: i32, %arg1: i32, %arg2: memref<32x128xf32, #tpu.memory_space<vmem>>, %arg3: memref<128x128xf32, #tpu.memory_space<vmem>>, %arg4: memref<1x128xf32, #tpu.memory_space<vmem>>, %arg5: memref<32x128xf32, #tpu.memory_space<vmem>>) attributes {dimension_semantics = [#tpu.dimension_semantics<parallel>, #tpu.dimension_semantics<parallel>], iteration_bounds = array<i64: 1, 1>, scalar_prefetch = 0 : i64, scratch_operands = 0 : i64, tpu.core_type = #tpu.core_type<tc>, window_params = [{transform_indices = @transform_0, window_bounds = array<i64: 32, 128>}, {transform_indices = @transform_1, window_bounds = array<i64: 128, 128>}, {transform_indices = @transform_2, window_bounds = array<i64: 1, 128>}, {transform_indices = @transform_3, window_bounds = array<i64: 32, 128>}]} {
    %c0 = arith.constant 0 : index
    %c0_0 = arith.constant 0 : index
    %0 = vector.load %arg2[%c0, %c0_0] : memref<32x128xf32, #tpu.memory_space<vmem>>, vector<32x128xf32>
    %c0_1 = arith.constant 0 : index
    %c0_2 = arith.constant 0 : index
    %1 = vector.load %arg3[%c0_1, %c0_2] : memref<128x128xf32, #tpu.memory_space<vmem>>, vector<128x128xf32>
    %cst = arith.constant dense<0.000000e+00> : vector<32x128xf32>
    %2 = tpu.matmul %0, %1, %cst {dimension_numbers = #tpu.dot_dimension_numbers<[1], [0], [0], [1], [0, 0, 1, 1], [], []>} : vector<32x128xf32>, vector<128x128xf32>, vector<32x128xf32> -> vector<32x128xf32>
    %c0_3 = arith.constant 0 : index
    %c0_4 = arith.constant 0 : index
    %3 = vector.load %arg4[%c0_3, %c0_4] : memref<1x128xf32, #tpu.memory_space<vmem>>, vector<1x128xf32>
    %4 = vector.broadcast %3 : vector<1x128xf32> to vector<32x128xf32>
    %5 = arith.addf %2, %4 : vector<32x128xf32>
    %c0_5 = arith.constant 0 : index
    %c0_6 = arith.constant 0 : index
    %6 = vector.load %arg5[%c0_5, %c0_6] : memref<32x128xf32, #tpu.memory_space<vmem>>, vector<32x128xf32>
    tpu.vector_store %arg5[%c0_5, %c0_6], %5 {strides = array<i32>} : memref<32x128xf32, #tpu.memory_space<vmem>>, vector<32x128xf32>,
    return
  }
  func.func @transform_0(%arg0: i32, %arg1: i32) -> (i32, i32) {
    %c0_i32 = arith.constant 0 : i32
    %c0_i32_0 = arith.constant 0 : i32
    return %arg1, %c0_i32 : i32, i32
  }
  func.func @transform_1(%arg0: i32, %arg1: i32) -> (i32, i32) {
    %c0_i32 = arith.constant 0 : i32
    %c0_i32_0 = arith.constant 0 : i32
    return %c0_i32, %arg0 : i32, i32
  }
  func.func @transform_2(%arg0: i32, %arg1: i32) -> (i32, i32) {
    %c0_i32 = arith.constant 0 : i32
    %c0_i32_0 = arith.constant 0 : i32
    return %c0_i32, %arg0 : i32, i32
  }
  func.func @transform_3(%arg0: i32, %arg1: i32) -> (i32, i32) {
    %c0_i32 = arith.constant 0 : i32
    return %arg1, %arg0 : i32, i32
  }
}

</mosaic_0001>

<llo_original>
// kernel: patches_forward.1
$region0: #{patches_forward.1}
  #allocation0 [shape = 'u32[]', space=smem, size = 0x4, offset = 0x4, fixed_abs, tag = 'smem constant byte address 0x4 - core index']
  #allocation1 [shape = 'u32[72,128]{1,0:T(1,128)}', space=vmem, size = 0x9000, scoped, tag = 'internal scratch']
  %s0 = inlined_call_operand.vmem [shape: f32[32,128], index: 0, kind: input, shape index: {}]
  %s1 = inlined_call_operand.vmem [shape: f32[128,128], index: 1, kind: input, shape index: {}]
  %s2 = inlined_call_operand.vmem [shape: f32[1,128], index: 2, kind: input, shape index: {}]
  %s3 = inlined_call_operand.hbm [shape: f32[32,128], index: 3, kind: output, shape index: {}]
  %s4 = sld [smem:[#allocation0]]
  $region22: #{patches_forward.1} parent=0
    _
  %s6 = ssub.s32 1, %s4
  %s7 = scalar_select 0, %s6, %s4
  $region1: #{patches_forward.1} parent=0
    #allocation2 [shape = 'u8[16384]{0}', space=vmem, size = 0x4000, scoped, tag = 'output window, operand 0, single buffered']
    #allocation3 [shape = 's32[1]{0}', space=sflag, size = 0x4, scoped, tag = 'scoped memory for patches_forward.1']
    %8 = vsyncpa [#allocation3], 0
    // Predicated region
    $region2: #{patches_forward.1} parent=1 // pred_check
      _
    $region3: #{patches_forward.1} parent=1 // pred_check_branch
      %10 = sbr.rel (0) target = $region5
    $region4: #{patches_forward.1} parent=1 // pred_region
      _
    $region5: #{patches_forward.1} parent=1 // pred_fallthru
      _
    // Predicated region
    $region6: #{patches_forward.1} parent=1 // pred_check
      _
    $region7: #{patches_forward.1} parent=1 // pred_check_branch
      %12 = sbr.rel (0) target = $region9
    $region8: #{patches_forward.1} parent=1 // pred_region
      _
    $region9: #{patches_forward.1} parent=1 // pred_fallthru
      _
    // Predicated region
    $region10: #{patches_forward.1} parent=1 // pred_check
      _
    $region11: #{patches_forward.1} parent=1 // pred_check_branch
      %14 = sbr.rel (0) target = $region13
    $region12: #{patches_forward.1} parent=1 // pred_region
      _
    $region13: #{patches_forward.1} parent=1 // pred_fallthru
      _
    %v15 = vld [vmem:[%s0] sm:$0xff]
    %v16 = vld [vmem:[%s0 + $0x8] sm:$0xff]
    %v17 = vld [vmem:[%s0 + $0x10] sm:$0xff]
    %v18 = vld [vmem:[%s0 + $0x18] sm:$0xff]
    %v19 = vld [vmem:[%s1] sm:$0xff]
    %v20 = vld [vmem:[%s1 + $0x8] sm:$0xff]
    %v21 = vld [vmem:[%s1 + $0x10] sm:$0xff]
    %v22 = vld [vmem:[%s1 + $0x18] sm:$0xff]
    %v23 = vld [vmem:[%s1 + $0x20] sm:$0xff]
    %v24 = vld [vmem:[%s1 + $0x28] sm:$0xff]
    %v25 = vld [vmem:[%s1 + $0x30] sm:$0xff]
    %v26 = vld [vmem:[%s1 + $0x38] sm:$0xff]
    %v27 = vld [vmem:[%s1 + $0x40] sm:$0xff]
    %v28 = vld [vmem:[%s1 + $0x48] sm:$0xff]
    %v29 = vld [vmem:[%s1 + $0x50] sm:$0xff]
    %v30 = vld [vmem:[%s1 + $0x58] sm:$0xff]
    %v31 = vld [vmem:[%s1 + $0x60] sm:$0xff]
    %v32 = vld [vmem:[%s1 + $0x68] sm:$0xff]
    %v33 = vld [vmem:[%s1 + $0x70] sm:$0xff]
    %v34 = vld [vmem:[%s1 + $0x78] sm:$0xff]
    %v35 = vld [vmem:[%s2] sm:$0x1]
    %v37 = vperm.slane %v35, 0
    %39 = vmatpush.msra.mxu0 %v34
    %40 = vmatpush.msra.mxu0 %v33
    %41 = vmatpush.msra.mxu0 %v32
    %42 = vmatpush.msra.mxu0 %v31
    %43 = vmatpush.msra.mxu0 %v30
    %44 = vmatpush.msra.mxu0 %v29
    %45 = vmatpush.msra.mxu0 %v28
    %46 = vmatpush.msra.mxu0 %v27
    %47 = vmatpush.msra.mxu0 %v26
    %48 = vmatpush.msra.mxu0 %v25
    %49 = vmatpush.msra.mxu0 %v24
    %50 = vmatpush.msra.mxu0 %v23
    %51 = vmatpush.msra.mxu0 %v22
    %52 = vmatpush.msra.mxu0 %v21
    %53 = vmatpush.msra.mxu0 %v20
    %54 = vmatpush.msra.mxu0 %v19
    %55 = vmatmul.f32.gmra.mxu0 %v15
    %v56 = vpop.f32.mrf.mxu0
    %v57 = vadd.f32 %v37, %v56
    %58 = vmatmul.f32.gmra.mxu0 %v16
    %v59 = vpop.f32.mrf.mxu0
    %v60 = vadd.f32 %v37, %v59
    %61 = vmatmul.f32.gmra.mxu0 %v17
    %v62 = vpop.f32.mrf.mxu0
    %v63 = vadd.f32 %v37, %v62
    %64 = vmatmul.f32.gmra.mxu0 %v18
    %v65 = vpop.f32.mrf.mxu0
    %v66 = vadd.f32 %v37, %v65
    %67 = vdwg.mxu0
    %68 = vst [vmem:[#allocation2] sm:$0xff] %v57
    %69 = vst [vmem:[#allocation2 + $0x8] sm:$0xff] %v60
    %70 = vst [vmem:[#allocation2 + $0x10] sm:$0xff] %v63
    %71 = vst [vmem:[#allocation2 + $0x18] sm:$0xff] %v66
    // Predicated region
    $region14: #{patches_forward.1} parent=1 // pred_check
      _
    $region15: #{patches_forward.1} parent=1 // pred_check_branch
      %73 = sbr.rel (0) target = $region17
    $region16: #{patches_forward.1} parent=1 // pred_region
      %75 = vsyncadd [#allocation3], 0
      %s76 = sshll.u32 [#allocation2], 4
      %s77 = int_to_ptr.vmem [resolvable:$true] %s76
      %s78 = sshll.u32 %s3, 4
      %s79 = int_to_ptr.hbm [resolvable:$true] %s78
      %84 = dma.vmem_to_hbm [thread:$0]  %s77, 512, %s79, [#allocation3], 128, 128, 8
    $region17: #{patches_forward.1} parent=1 // pred_fallthru
      _
    // Predicated region
    $region18: #{patches_forward.1} parent=1 // pred_check
      _
    $region19: #{patches_forward.1} parent=1 // pred_check_branch
      %86 = sbr.rel (0) target = $region21
    $region20: #{patches_forward.1} parent=1 // pred_region
      %88 = dma.done [#allocation3], 512
    $region21: #{patches_forward.1} parent=1 // pred_fallthru
      _
    %89 = vsyncpa [#allocation3], 1

</llo_original>
